<compile_context>
chip_gen: v5e
topology: v5e:2x2
jax: 0.10.0
libtpu: 0.0.40
codegen_flags: <defaults>
</compile_context>

<pallas_src>
import functools

import jax
import jax.numpy as jnp
from jax.experimental import pallas as pl
from jax.experimental.pallas import tpu as pltpu

BN_EPS = 1e-5
MXU_DTYPE = jnp.bfloat16      # matmul operand dtype (accumulation stays f32)
ACT_DTYPE = jnp.bfloat16      # inter-stage activation storage dtype
LANE = 128                    # lane-dense feature padding
SUBLANE_BF16 = 16             # bf16 packs 16 rows per sublane tile
MAX_TILE_N = 512              # measured HBM-roofline knee for streaming kernels


def _round_up(x, m):
    return (x + m - 1) // m * m


def _pad2(a, rows, cols):
    return jnp.pad(a, ((0, rows - a.shape[0]), (0, cols - a.shape[1])))


def _pad1(v, cols):
    return jnp.pad(v, (0, cols - v.shape[0]))


# --------------------------- kernels ---------------------------

def _fc_stats_kernel(x_ref, w_ref, h_ref, stats_ref):
    """h = x @ w (bf16 MXU, f32 acc); store h as bf16; accumulate [sum, sumsq].

    x is zero-padded in both batch and feature dims, so padded rows/cols of h are
    exactly zero and contribute nothing to the statistics -> no masking needed.
    """
    i = pl.program_id(0)

    @pl.when(i == 0)
    def _():
        stats_ref[...] = jnp.zeros_like(stats_ref)

    h = jnp.dot(x_ref[...].astype(MXU_DTYPE), w_ref[...],
                preferred_element_type=jnp.float32)
    h_ref[...] = h.astype(h_ref.dtype)            # bf16 write-back (half HBM traffic)

    # stats from the f32 accumulator (before the bf16 cast); slice accumulation
    stats_ref[0:1, :] += jnp.sum(h, axis=0, keepdims=True)
    stats_ref[1:2, :] += jnp.sum(h * h, axis=0, keepdims=True)


def _bn_relu_fc_stats_kernel(h_ref, ss_ref, w_ref, h2_ref, stats_ref, *,
                             n_real, tile_n):
    """a = relu(h * scale + shift); h2 = a @ w; accumulate stats of h2.

    Padded batch rows become relu(shift) != 0, so they must be excluded from the
    statistics. Padding lives only in the last batch tile, so masking is gated to
    that tile; every other tile takes the unmasked path.
    """
    i = pl.program_id(0)
    last = pl.num_programs(0) - 1

    @pl.when(i == 0)
    def _():
        stats_ref[...] = jnp.zeros_like(stats_ref)

    ss = ss_ref[...]                              # (2, C) f32: row0=scale, row1=shift
    a = jnp.maximum(h_ref[...].astype(jnp.float32) * ss[0:1, :] + ss[1:2, :], 0.0)
    h2 = jnp.dot(a.astype(MXU_DTYPE), w_ref[...],
                 preferred_element_type=jnp.float32)
    h2_ref[...] = h2.astype(h2_ref.dtype)

    @pl.when(i != last)
    def _():
        stats_ref[0:1, :] += jnp.sum(h2, axis=0, keepdims=True)
        stats_ref[1:2, :] += jnp.sum(h2 * h2, axis=0, keepdims=True)

    @pl.when(i == last)
    def _():
        rows = jax.lax.broadcasted_iota(jnp.int32, h2.shape, 0) + i * tile_n
        hm = jnp.where(rows < n_real, h2, 0.0)
        stats_ref[0:1, :] += jnp.sum(hm, axis=0, keepdims=True)
        stats_ref[1:2, :] += jnp.sum(hm * hm, axis=0, keepdims=True)


def _bn_relu_fc_bias_kernel(h_ref, ss_ref, w_ref, b_ref, o_ref):
    """o = relu(h * scale + shift) @ w + b."""
    ss = ss_ref[...]
    a = jnp.maximum(h_ref[...].astype(jnp.float32) * ss[0:1, :] + ss[1:2, :], 0.0)
    o = jnp.dot(a.astype(MXU_DTYPE), w_ref[...],
                preferred_element_type=jnp.float32) + b_ref[...]
    o_ref[...] = o.astype(o_ref.dtype)


# --------------------------- host-side helpers ---------------------------

def _fold_bn(stats, gamma, beta, n):
    """Fold training-mode BN into one (scale, shift) per feature. f32 throughout.
    Single-pass variance (E[h^2] - mean^2), clamped at 0 to guard cancellation."""
    mu = stats[0] / n
    var = jnp.maximum(stats[1] / n - mu * mu, 0.0)      # biased batch variance
    scale = gamma * jax.lax.rsqrt(var + BN_EPS)
    shift = beta - mu * scale
    return jnp.stack([scale, shift], axis=0)            # (2, C)


def _vmem_budget_bytes():
    # 0.75x physical VMEM: 48 MiB on v7x (64 MiB/TC), 96 MiB on v5e/v6e (128 MiB).
    try:
        return int(0.75 * pltpu.get_tpu_info().vmem_capacity_bytes)
    except Exception:
        return 96 << 20


def _vmem_limit(block_bytes, budget):
    return int(min(budget, max(8 << 20, block_bytes + (2 << 20))))


def mlp_pallas(x, params):
    """x: (N, in_features) f32. params: PyTorch-shaped (weights pre-transposed)."""
    n, in_f = x.shape
    hid = params["w1"].shape[1]
    out_f = params["w3"].shape[1]

    in_p = _round_up(in_f, LANE)
    hid_p = _round_up(hid, LANE)
    out_p = _round_up(out_f, LANE)

    budget = _vmem_budget_bytes()

    # Batch tile: 512 rows (roofline knee), rounded to bf16 sublane packing (16).
    tile_n = min(MAX_TILE_N, _round_up(n, SUBLANE_BF16))

    def _stage2_bytes(t):        # largest per-stage working set
        return (2 * t * hid_p * 2            # h1 in, double-buffered, bf16
                + 2 * t * hid_p * 2          # h2 out, double-buffered, bf16
                + hid_p * hid_p * 2          # w2, single-buffered, bf16
                + 3 * 2 * hid_p * 4)         # ss + stats buffers, f32

    while tile_n > SUBLANE_BF16 and _stage2_bytes(tile_n) + (2 << 20) > budget:
        tile_n = max(SUBLANE_BF16, _round_up(tile_n // 2, SUBLANE_BF16))

    n_p = _round_up(n, tile_n)
    grid = (n_p // tile_n,)

    f32 = jnp.float32
    xp = _pad2(x.astype(f32), n_p, in_p)
    w1 = _pad2(params["w1"], in_p, hid_p).astype(MXU_DTYPE)
    w2 = _pad2(params["w2"], hid_p, hid_p).astype(MXU_DTYPE)
    w3 = _pad2(params["w3"], hid_p, out_p).astype(MXU_DTYPE)
    b3 = _pad1(params["b3"], out_p).reshape(1, out_p).astype(f32)
    g1, be1 = _pad1(params["g1"], hid_p), _pad1(params["be1"], hid_p)
    g2, be2 = _pad1(params["g2"], hid_p), _pad1(params["be2"], hid_p)
    # NOTE: b1 / b2 are intentionally not fed to the kernels — a bias added right
    # before training-mode BatchNorm is cancelled exactly by the mean subtraction.

    act_in = pl.BlockSpec((tile_n, in_p), lambda i: (i, 0))
    act_hid = pl.BlockSpec((tile_n, hid_p), lambda i: (i, 0))
    act_out = pl.BlockSpec((tile_n, out_p), lambda i: (i, 0))
    stats_out = pl.BlockSpec((2, hid_p), lambda i: (0, 0))

    def resident(shape):
        # Constant index map -> a second pipeline buffer is pure waste: single-buffer.
        idx = lambda i: (0, 0)
        if hasattr(pl, "Buffered"):
            try:
                return pl.BlockSpec(shape, idx, pipeline_mode=pl.Buffered(1))
            except TypeError:
                pass
        return pl.BlockSpec(shape, idx)

    # ---- stage 1: h1 = x @ w1 ; per-feature stats of h1 ----
    bytes1 = (2 * tile_n * in_p * 4 + in_p * hid_p * 2
              + 2 * tile_n * hid_p * 2 + 2 * 2 * hid_p * 4)
    h1, st1 = pl.pallas_call(
        _fc_stats_kernel,
        grid=grid,
        in_specs=[act_in, resident((in_p, hid_p))],
        out_specs=(act_hid, stats_out),
        out_shape=(jax.ShapeDtypeStruct((n_p, hid_p), ACT_DTYPE),
                   jax.ShapeDtypeStruct((2, hid_p), f32)),
        compiler_params=pltpu.CompilerParams(
            dimension_semantics=("arbitrary",),
            vmem_limit_bytes=_vmem_limit(bytes1, budget)),
    )(xp, w1)
    ss1 = _fold_bn(st1, g1, be1, n)

    # ---- stage 2: h2 = relu(bn1(h1)) @ w2 ; per-feature stats of h2 ----
    bytes2 = (2 * tile_n * hid_p * 2 + 2 * hid_p * 4 + hid_p * hid_p * 2
              + 2 * tile_n * hid_p * 2 + 2 * 2 * hid_p * 4)
    h2, st2 = pl.pallas_call(
        functools.partial(_bn_relu_fc_stats_kernel, n_real=n, tile_n=tile_n),
        grid=grid,
        in_specs=[act_hid, resident((2, hid_p)), resident((hid_p, hid_p))],
        out_specs=(act_hid, stats_out),
        out_shape=(jax.ShapeDtypeStruct((n_p, hid_p), ACT_DTYPE),
                   jax.ShapeDtypeStruct((2, hid_p), f32)),
        compiler_params=pltpu.CompilerParams(
            dimension_semantics=("arbitrary",),
            vmem_limit_bytes=_vmem_limit(bytes2, budget)),
    )(h1, ss1, w2)
    ss2 = _fold_bn(st2, g2, be2, n)

    # ---- stage 3: out = relu(bn2(h2)) @ w3 + b3 ----
    bytes3 = (2 * tile_n * hid_p * 2 + 2 * hid_p * 4 + hid_p * out_p * 2
              + out_p * 4 + 2 * tile_n * out_p * 4)
    out = pl.pallas_call(
        _bn_relu_fc_bias_kernel,
        grid=grid,
        in_specs=[act_hid, resident((2, hid_p)), resident((hid_p, out_p)),
                  resident((1, out_p))],
        out_specs=act_out,
        out_shape=jax.ShapeDtypeStruct((n_p, out_p), f32),
        compiler_params=pltpu.CompilerParams(
            dimension_semantics=("parallel",),
            vmem_limit_bytes=_vmem_limit(bytes3, budget)),
    )(h2, ss2, w3, b3)

    return out[:n, :out_f]


# --------------------------- parameters & reference ---------------------------

def init_params(key, in_features, hidden_features, out_features):
    """PyTorch-shaped params; nn.Linear(in,out) weight (out,in) stored transposed
    as (in,out). Gamma/beta made non-trivial so the BN affine path is exercised."""
    ks = jax.random.split(key, 10)

    def linear(kw, kb, fan_in, fan_out):
        bound = 1.0 / jnp.sqrt(fan_in)
        w = jax.random.uniform(kw, (fan_in, fan_out), jnp.float32, -bound, bound)
        b = jax.random.uniform(kb, (fan_out,), jnp.float32, -bound, bound)
        return w, b

    w1, b1 = linear(ks[0], ks[1], in_features, hidden_features)
    w2, b2 = linear(ks[2], ks[3], hidden_features, hidden_features)
    w3, b3 = linear(ks[4], ks[5], hidden_features, out_features)
    g1 = jax.random.uniform(ks[6], (hidden_features,), jnp.float32, 0.5, 1.5)
    be1 = jax.random.uniform(ks[7], (hidden_features,), jnp.float32, -0.5, 0.5)
    g2 = jax.random.uniform(ks[8], (hidden_features,), jnp.float32, 0.5, 1.5)
    be2 = jax.random.uniform(ks[9], (hidden_features,), jnp.float32, -0.5, 0.5)
    return dict(w1=w1, b1=b1, g1=g1, be1=be1,
                w2=w2, b2=b2, g2=g2, be2=be2,
                w3=w3, b3=b3)


def mlp_reference(x, p):
    """Pure-JAX f32 reference matching PyTorch training-mode forward exactly
    (including the b1/b2 biases that the kernel provably drops)."""
    def bn(h, g, b):
        mu = jnp.mean(h, axis=0, keepdims=True)
        var = jnp.mean((h - mu) ** 2, axis=0, keepdims=True)
        return (h - mu) / jnp.sqrt(var + BN_EPS) * g + b

    h = x @ p["w1"] + p["b1"]
    h = jnp.maximum(bn(h, p["g1"], p["be1"]), 0.0)
    h = h @ p["w2"] + p["b2"]
    h = jnp.maximum(bn(h, p["g2"], p["be2"]), 0.0)
    return h @ p["w3"] + p["b3"]


# TODO(synk): BatchNorm running-mean/var buffer updates (training side effect) are
# not modeled; they do not affect the forward output.

if __name__ == "__main__":
    in_features, hidden_features, out_features = 16, 32, 16
    batch = 8

    key = jax.random.PRNGKey(0)
    kx, kp = jax.random.split(key)
    x = jax.random.normal(kx, (batch, in_features), jnp.float32)
    params = init_params(kp, in_features, hidden_features, out_features)

    out = jax.jit(mlp_pallas)(x, params)
    out = jax.block_until_ready(out)

    ref = mlp_reference(x, params)
    assert out.shape == (batch, out_features)
    max_err = float(jnp.max(jnp.abs(out - ref)))
    # bf16 matmul operands + bf16 inter-stage activations (f32 accumulation / BN math)
    # -> loosened tolerance vs f32 reference.
    assert jnp.allclose(out, ref, atol=5e-2, rtol=5e-2), \
        f"mismatch vs reference (max abs err {max_err})"

    print("KERNEL_OK")
</pallas_src>

<mosaic_0001>
module attributes {stable_mosaic.version = 11 : i64} {
  func.func @_fc_stats_kernel(%arg0: i32, %arg1: memref<16x128xf32, #tpu.memory_space<vmem>>, %arg2: memref<128x128xbf16, #tpu.memory_space<vmem>>, %arg3: memref<16x128xbf16, #tpu.memory_space<vmem>>, %arg4: memref<2x128xf32, #tpu.memory_space<vmem>>) attributes {dimension_semantics = [#tpu.dimension_semantics<arbitrary>], iteration_bounds = array<i64: 1>, scalar_prefetch = 0 : i64, scratch_operands = 0 : i64, tpu.core_type = #tpu.core_type<tc>, window_params = [{transform_indices = @transform_0, window_bounds = array<i64: 16, 128>}, {pipeline_mode = #tpu.pipeline_mode<synchronous>, transform_indices = @transform_1, window_bounds = array<i64: 128, 128>}, {transform_indices = @transform_2, window_bounds = array<i64: 16, 128>}, {pipeline_mode = #tpu.pipeline_mode<synchronous>, transform_indices = @transform_3, window_bounds = array<i64: 2, 128>}]} {
    %c0_i32 = arith.constant 0 : i32
    %0 = arith.cmpi eq, %arg0, %c0_i32 : i32
    %1 = arith.extui %0 : i1 to i32
    %c0_i32_0 = arith.constant 0 : i32
    %2 = arith.cmpi ne, %1, %c0_i32_0 : i32
    scf.if %2 {
      %cst_15 = arith.constant 0.000000e+00 : f32
      %20 = vector.broadcast %cst_15 : f32 to vector<2x128xf32>
      %c0_16 = arith.constant 0 : index
      %c0_17 = arith.constant 0 : index
      %21 = vector.load %arg4[%c0_16, %c0_17] : memref<2x128xf32, #tpu.memory_space<vmem>>, vector<2x128xf32>
      tpu.vector_store %arg4[%c0_16, %c0_17], %20 {strides = array<i32>} : memref<2x128xf32, #tpu.memory_space<vmem>>, vector<2x128xf32>,
    } else {
    }
    %c0 = arith.constant 0 : index
    %c0_1 = arith.constant 0 : index
    %3 = vector.load %arg1[%c0, %c0_1] : memref<16x128xf32, #tpu.memory_space<vmem>>, vector<16x128xf32>
    %4 = arith.truncf %3 : vector<16x128xf32> to vector<16x128xbf16>
    %c0_2 = arith.constant 0 : index
    %c0_3 = arith.constant 0 : index
    %5 = vector.load %arg2[%c0_2, %c0_3] : memref<128x128xbf16, #tpu.memory_space<vmem>>, vector<128x128xbf16>
    %cst = arith.constant dense<0.000000e+00> : vector<16x128xf32>
    %6 = tpu.matmul %4, %5, %cst {dimension_numbers = #tpu.dot_dimension_numbers<[1], [0], [0], [1], [0, 0, 1, 1], [], []>} : vector<16x128xbf16>, vector<128x128xbf16>, vector<16x128xf32> -> vector<16x128xf32>
    %7 = arith.truncf %6 : vector<16x128xf32> to vector<16x128xbf16>
    %c0_4 = arith.constant 0 : index
    %c0_5 = arith.constant 0 : index
    %8 = vector.load %arg3[%c0_4, %c0_5] : memref<16x128xbf16, #tpu.memory_space<vmem>>, vector<16x128xbf16>
    tpu.vector_store %arg3[%c0_4, %c0_5], %7 {strides = array<i32>} : memref<16x128xbf16, #tpu.memory_space<vmem>>, vector<16x128xbf16>,
    %c0_6 = arith.constant 0 : index
    %c0_7 = arith.constant 0 : index
    %9 = vector.load %arg4[%c0_6, %c0_7] : memref<2x128xf32, #tpu.memory_space<vmem>>, vector<1x128xf32>
    %cst_8 = arith.constant dense<0.000000e+00> : vector<128xf32>
    %10 = vector.multi_reduction <add>, %6, %cst_8 [0] : vector<16x128xf32> to vector<128xf32>
    %11 = vector.shape_cast %10 : vector<128xf32> to vector<1x128xf32>
    %12 = arith.addf %9, %11 : vector<1x128xf32>
    %c0_9 = arith.constant 0 : index
    %c0_10 = arith.constant 0 : index
    %13 = vector.load %arg4[%c0_9, %c0_10] : memref<2x128xf32, #tpu.memory_space<vmem>>, vector<1x128xf32>
    tpu.vector_store %arg4[%c0_9, %c0_10], %12 {strides = array<i32>} : memref<2x128xf32, #tpu.memory_space<vmem>>, vector<1x128xf32>,
    %c1 = arith.constant 1 : index
    %c0_11 = arith.constant 0 : index
    %14 = vector.load %arg4[%c1, %c0_11] : memref<2x128xf32, #tpu.memory_space<vmem>>, vector<1x128xf32>
    %15 = arith.mulf %6, %6 : vector<16x128xf32>
    %cst_12 = arith.constant dense<0.000000e+00> : vector<128xf32>
    %16 = vector.multi_reduction <add>, %15, %cst_12 [0] : vector<16x128xf32> to vector<128xf32>
    %17 = vector.shape_cast %16 : vector<128xf32> to vector<1x128xf32>
    %18 = arith.addf %14, %17 : vector<1x128xf32>
    %c1_13 = arith.constant 1 : index
    %c0_14 = arith.constant 0 : index
    %19 = vector.load %arg4[%c1_13, %c0_14] : memref<2x128xf32, #tpu.memory_space<vmem>>, vector<1x128xf32>
    tpu.vector_store %arg4[%c1_13, %c0_14], %18 {strides = array<i32>} : memref<2x128xf32, #tpu.memory_space<vmem>>, vector<1x128xf32>,
    return
  }
  func.func @transform_0(%arg0: i32) -> (i32, i32) {
    %c0_i32 = arith.constant 0 : i32
    %c0_i32_0 = arith.constant 0 : i32
    return %arg0, %c0_i32 : i32, i32
  }
  func.func @transform_1(%arg0: i32) -> (i32, i32) {
    %c0_i32 = arith.constant 0 : i32
    %c0_i32_0 = arith.constant 0 : i32
    %c0_i32_1 = arith.constant 0 : i32
    return %c0_i32, %c0_i32_0 : i32, i32
  }
  func.func @transform_2(%arg0: i32) -> (i32, i32) {
    %c0_i32 = arith.constant 0 : i32
    %c0_i32_0 = arith.constant 0 : i32
    return %arg0, %c0_i32 : i32, i32
  }
  func.func @transform_3(%arg0: i32) -> (i32, i32) {
    %c0_i32 = arith.constant 0 : i32
    %c0_i32_0 = arith.constant 0 : i32
    %c0_i32_1 = arith.constant 0 : i32
    return %c0_i32, %c0_i32_0 : i32, i32
  }
}

module attributes {stable_mosaic.version = 11 : i64} {
  func.func @_bn_relu_fc_stats_kernel(%arg0: i32, %arg1: memref<16x128xbf16, #tpu.memory_space<vmem>>, %arg2: memref<2x128xf32, #tpu.memory_space<vmem>>, %arg3: memref<128x128xbf16, #tpu.memory_space<vmem>>, %arg4: memref<16x128xbf16, #tpu.memory_space<vmem>>, %arg5: memref<2x128xf32, #tpu.memory_space<vmem>>) attributes {dimension_semantics = [#tpu.dimension_semantics<arbitrary>], iteration_bounds = array<i64: 1>, scalar_prefetch = 0 : i64, scratch_operands = 0 : i64, tpu.core_type = #tpu.core_type<tc>, window_params = [{transform_indices = @transform_0, window_bounds = array<i64: 16, 128>}, {pipeline_mode = #tpu.pipeline_mode<synchronous>, transform_indices = @transform_1, window_bounds = array<i64: 2, 128>}, {pipeline_mode = #tpu.pipeline_mode<synchronous>, transform_indices = @transform_2, window_bounds = array<i64: 128, 128>}, {transform_indices = @transform_3, window_bounds = array<i64: 16, 128>}, {pipeline_mode = #tpu.pipeline_mode<synchronous>, transform_indices = @transform_4, window_bounds = array<i64: 2, 128>}]} {
    %c0_i32 = arith.constant 0 : i32
    %0 = arith.cmpi eq, %arg0, %c0_i32 : i32
    %1 = arith.extui %0 : i1 to i32
    %c0_i32_0 = arith.constant 0 : i32
    %2 = arith.cmpi ne, %1, %c0_i32_0 : i32
    scf.if %2 {
      %cst_13 = arith.constant 0.000000e+00 : f32
      %25 = vector.broadcast %cst_13 : f32 to vector<2x128xf32>
      %c0_14 = arith.constant 0 : index
      %c0_15 = arith.constant 0 : index
      %26 = vector.load %arg5[%c0_14, %c0_15] : memref<2x128xf32, #tpu.memory_space<vmem>>, vector<2x128xf32>
      tpu.vector_store %arg5[%c0_14, %c0_15], %25 {strides = array<i32>} : memref<2x128xf32, #tpu.memory_space<vmem>>, vector<2x128xf32>,
    } else {
    }
    %c0 = arith.constant 0 : index
    %c0_1 = arith.constant 0 : index
    %3 = vector.load %arg2[%c0, %c0_1] : memref<2x128xf32, #tpu.memory_space<vmem>>, vector<2x128xf32>
    %c0_2 = arith.constant 0 : index
    %c0_3 = arith.constant 0 : index
    %4 = vector.load %arg1[%c0_2, %c0_3] : memref<16x128xbf16, #tpu.memory_space<vmem>>, vector<16x128xbf16>
    %5 = arith.extf %4 : vector<16x128xbf16> to vector<16x128xf32>
    %6 = vector.extract_strided_slice %3 {offsets = [0, 0], sizes = [1, 128], strides = [1, 1]} : vector<2x128xf32> to vector<1x128xf32>
    %7 = vector.broadcast %6 : vector<1x128xf32> to vector<16x128xf32>
    %8 = arith.mulf %5, %7 : vector<16x128xf32>
    %9 = vector.extract_strided_slice %3 {offsets = [1, 0], sizes = [1, 128], strides = [1, 1]} : vector<2x128xf32> to vector<1x128xf32>
    %10 = vector.broadcast %9 : vector<1x128xf32> to vector<16x128xf32>
    %11 = arith.addf %8, %10 : vector<16x128xf32>
    %cst = arith.constant 0.000000e+00 : f32
    %12 = vector.broadcast %cst : f32 to vector<16x128xf32>
    %13 = arith.maximumf %11, %12 : vector<16x128xf32>
    %14 = arith.truncf %13 : vector<16x128xf32> to vector<16x128xbf16>
    %c0_4 = arith.constant 0 : index
    %c0_5 = arith.constant 0 : index
    %15 = vector.load %arg3[%c0_4, %c0_5] : memref<128x128xbf16, #tpu.memory_space<vmem>>, vector<128x128xbf16>
    %cst_6 = arith.constant dense<0.000000e+00> : vector<16x128xf32>
    %16 = tpu.matmul %14, %15, %cst_6 {dimension_numbers = #tpu.dot_dimension_numbers<[1], [0], [0], [1], [0, 0, 1, 1], [], []>} : vector<16x128xbf16>, vector<128x128xbf16>, vector<16x128xf32> -> vector<16x128xf32>
    %17 = arith.truncf %16 : vector<16x128xf32> to vector<16x128xbf16>
    %c0_7 = arith.constant 0 : index
    %c0_8 = arith.constant 0 : index
    %18 = vector.load %arg4[%c0_7, %c0_8] : memref<16x128xbf16, #tpu.memory_space<vmem>>, vector<16x128xbf16>
    tpu.vector_store %arg4[%c0_7, %c0_8], %17 {strides = array<i32>} : memref<16x128xbf16, #tpu.memory_space<vmem>>, vector<16x128xbf16>,
    %c0_i32_9 = arith.constant 0 : i32
    %19 = arith.cmpi ne, %arg0, %c0_i32_9 : i32
    %20 = arith.extui %19 : i1 to i32
    %c0_i32_10 = arith.constant 0 : i32
    %21 = arith.cmpi ne, %20, %c0_i32_10 : i32
    scf.if %21 {
      %c0_13 = arith.constant 0 : index
      %c0_14 = arith.constant 0 : index
      %25 = vector.load %arg5[%c0_13, %c0_14] : memref<2x128xf32, #tpu.memory_space<vmem>>, vector<1x128xf32>
      %cst_15 = arith.constant dense<0.000000e+00> : vector<128xf32>
      %26 = vector.multi_reduction <add>, %16, %cst_15 [0] : vector<16x128xf32> to vector<128xf32>
      %27 = vector.shape_cast %26 : vector<128xf32> to vector<1x128xf32>
      %28 = arith.addf %25, %27 : vector<1x128xf32>
      %c0_16 = arith.constant 0 : index
      %c0_17 = arith.constant 0 : index
      %29 = vector.load %arg5[%c0_16, %c0_17] : memref<2x128xf32, #tpu.memory_space<vmem>>, vector<1x128xf32>
      tpu.vector_store %arg5[%c0_16, %c0_17], %28 {strides = array<i32>} : memref<2x128xf32, #tpu.memory_space<vmem>>, vector<1x128xf32>,
      %c1 = arith.constant 1 : index
      %c0_18 = arith.constant 0 : index
      %30 = vector.load %arg5[%c1, %c0_18] : memref<2x128xf32, #tpu.memory_space<vmem>>, vector<1x128xf32>
      %31 = arith.mulf %16, %16 : vector<16x128xf32>
      %cst_19 = arith.constant dense<0.000000e+00> : vector<128xf32>
      %32 = vector.multi_reduction <add>, %31, %cst_19 [0] : vector<16x128xf32> to vector<128xf32>
      %33 = vector.shape_cast %32 : vector<128xf32> to vector<1x128xf32>
      %34 = arith.addf %30, %33 : vector<1x128xf32>
      %c1_20 = arith.constant 1 : index
      %c0_21 = arith.constant 0 : index
      %35 = vector.load %arg5[%c1_20, %c0_21] : memref<2x128xf32, #tpu.memory_space<vmem>>, vector<1x128xf32>
      tpu.vector_store %arg5[%c1_20, %c0_21], %34 {strides = array<i32>} : memref<2x128xf32, #tpu.memory_space<vmem>>, vector<1x128xf32>,
    } else {
    }
    %c0_i32_11 = arith.constant 0 : i32
    %22 = arith.cmpi eq, %arg0, %c0_i32_11 : i32
    %23 = arith.extui %22 : i1 to i32
    %c0_i32_12 = arith.constant 0 : i32
    %24 = arith.cmpi ne, %23, %c0_i32_12 : i32
    scf.if %24 {
      %25 = tpu.iota {dimensions = array<i32: 0>} : vector<16x128xi32>
      %c16_i32 = arith.constant 16 : i32
      %26 = arith.muli %arg0, %c16_i32 : i32
      %27 = vector.broadcast %26 : i32 to vector<16x128xi32>
      %28 = arith.addi %25, %27 : vector<16x128xi32>
      %c8_i32 = arith.constant 8 : i32
      %29 = vector.broadcast %c8_i32 : i32 to vector<16x128xi32>
      %30 = arith.cmpi slt, %28, %29 : vector<16x128xi32>
      %cst_13 = arith.constant 0.000000e+00 : f32
      %31 = vector.broadcast %cst_13 : f32 to vector<16x128xf32>
      %32 = arith.select %30, %16, %31 : vector<16x128xi1>, vector<16x128xf32>
      %c0_14 = arith.constant 0 : index
      %c0_15 = arith.constant 0 : index
      %33 = vector.load %arg5[%c0_14, %c0_15] : memref<2x128xf32, #tpu.memory_space<vmem>>, vector<1x128xf32>
      %cst_16 = arith.constant dense<0.000000e+00> : vector<128xf32>
      %34 = vector.multi_reduction <add>, %32, %cst_16 [0] : vector<16x128xf32> to vector<128xf32>
      %35 = vector.shape_cast %34 : vector<128xf32> to vector<1x128xf32>
      %36 = arith.addf %33, %35 : vector<1x128xf32>
      %c0_17 = arith.constant 0 : index
      %c0_18 = arith.constant 0 : index
      %37 = vector.load %arg5[%c0_17, %c0_18] : memref<2x128xf32, #tpu.memory_space<vmem>>, vector<1x128xf32>
      tpu.vector_store %arg5[%c0_17, %c0_18], %36 {strides = array<i32>} : memref<2x128xf32, #tpu.memory_space<vmem>>, vector<1x128xf32>,
      %c1 = arith.constant 1 : index
      %c0_19 = arith.constant 0 : index
      %38 = vector.load %arg5[%c1, %c0_19] : memref<2x128xf32, #tpu.memory_space<vmem>>, vector<1x128xf32>
      %39 = arith.mulf %32, %32 : vector<16x128xf32>
      %cst_20 = arith.constant dense<0.000000e+00> : vector<128xf32>
      %40 = vector.multi_reduction <add>, %39, %cst_20 [0] : vector<16x128xf32> to vector<128xf32>
      %41 = vector.shape_cast %40 : vector<128xf32> to vector<1x128xf32>
      %42 = arith.addf %38, %41 : vector<1x128xf32>
      %c1_21 = arith.constant 1 : index
      %c0_22 = arith.constant 0 : index
      %43 = vector.load %arg5[%c1_21, %c0_22] : memref<2x128xf32, #tpu.memory_space<vmem>>, vector<1x128xf32>
      tpu.vector_store %arg5[%c1_21, %c0_22], %42 {strides = array<i32>} : memref<2x128xf32, #tpu.memory_space<vmem>>, vector<1x128xf32>,
    } else {
    }
    return
  }
  func.func @transform_0(%arg0: i32) -> (i32, i32) {
    %c0_i32 = arith.constant 0 : i32
    %c0_i32_0 = arith.constant 0 : i32
    return %arg0, %c0_i32 : i32, i32
  }
  func.func @transform_1(%arg0: i32) -> (i32, i32) {
    %c0_i32 = arith.constant 0 : i32
    %c0_i32_0 = arith.constant 0 : i32
    %c0_i32_1 = arith.constant 0 : i32
    return %c0_i32, %c0_i32_0 : i32, i32
  }
  func.func @transform_2(%arg0: i32) -> (i32, i32) {
    %c0_i32 = arith.constant 0 : i32
    %c0_i32_0 = arith.constant 0 : i32
    %c0_i32_1 = arith.constant 0 : i32
    return %c0_i32, %c0_i32_0 : i32, i32
  }
  func.func @transform_3(%arg0: i32) -> (i32, i32) {
    %c0_i32 = arith.constant 0 : i32
    %c0_i32_0 = arith.constant 0 : i32
    return %arg0, %c0_i32 : i32, i32
  }
  func.func @transform_4(%arg0: i32) -> (i32, i32) {
    %c0_i32 = arith.constant 0 : i32
    %c0_i32_0 = arith.constant 0 : i32
    %c0_i32_1 = arith.constant 0 : i32
    return %c0_i32, %c0_i32_0 : i32, i32
  }
}

module attributes {stable_mosaic.version = 11 : i64} {
  func.func @_bn_relu_fc_bias_kernel(%arg0: i32, %arg1: memref<16x128xbf16, #tpu.memory_space<vmem>>, %arg2: memref<2x128xf32, #tpu.memory_space<vmem>>, %arg3: memref<128x128xbf16, #tpu.memory_space<vmem>>, %arg4: memref<1x128xf32, #tpu.memory_space<vmem>>, %arg5: memref<16x128xf32, #tpu.memory_space<vmem>>) attributes {dimension_semantics = [#tpu.dimension_semantics<parallel>], iteration_bounds = array<i64: 1>, scalar_prefetch = 0 : i64, scratch_operands = 0 : i64, tpu.core_type = #tpu.core_type<tc>, window_params = [{transform_indices = @transform_0, window_bounds = array<i64: 16, 128>}, {pipeline_mode = #tpu.pipeline_mode<synchronous>, transform_indices = @transform_1, window_bounds = array<i64: 2, 128>}, {pipeline_mode = #tpu.pipeline_mode<synchronous>, transform_indices = @transform_2, window_bounds = array<i64: 128, 128>}, {pipeline_mode = #tpu.pipeline_mode<synchronous>, transform_indices = @transform_3, window_bounds = array<i64: 1, 128>}, {transform_indices = @transform_4, window_bounds = array<i64: 16, 128>}]} {
    %c0 = arith.constant 0 : index
    %c0_0 = arith.constant 0 : index
    %0 = vector.load %arg2[%c0, %c0_0] : memref<2x128xf32, #tpu.memory_space<vmem>>, vector<2x128xf32>
    %c0_1 = arith.constant 0 : index
    %c0_2 = arith.constant 0 : index
    %1 = vector.load %arg1[%c0_1, %c0_2] : memref<16x128xbf16, #tpu.memory_space<vmem>>, vector<16x128xbf16>
    %2 = arith.extf %1 : vector<16x128xbf16> to vector<16x128xf32>
    %3 = vector.extract_strided_slice %0 {offsets = [0, 0], sizes = [1, 128], strides = [1, 1]} : vector<2x128xf32> to vector<1x128xf32>
    %4 = vector.broadcast %3 : vector<1x128xf32> to vector<16x128xf32>
    %5 = arith.mulf %2, %4 : vector<16x128xf32>
    %6 = vector.extract_strided_slice %0 {offsets = [1, 0], sizes = [1, 128], strides = [1, 1]} : vector<2x128xf32> to vector<1x128xf32>
    %7 = vector.broadcast %6 : vector<1x128xf32> to vector<16x128xf32>
    %8 = arith.addf %5, %7 : vector<16x128xf32>
    %cst = arith.constant 0.000000e+00 : f32
    %9 = vector.broadcast %cst : f32 to vector<16x128xf32>
    %10 = arith.maximumf %8, %9 : vector<16x128xf32>
    %11 = arith.truncf %10 : vector<16x128xf32> to vector<16x128xbf16>
    %c0_3 = arith.constant 0 : index
    %c0_4 = arith.constant 0 : index
    %12 = vector.load %arg3[%c0_3, %c0_4] : memref<128x128xbf16, #tpu.memory_space<vmem>>, vector<128x128xbf16>
    %cst_5 = arith.constant dense<0.000000e+00> : vector<16x128xf32>
    %13 = tpu.matmul %11, %12, %cst_5 {dimension_numbers = #tpu.dot_dimension_numbers<[1], [0], [0], [1], [0, 0, 1, 1], [], []>} : vector<16x128xbf16>, vector<128x128xbf16>, vector<16x128xf32> -> vector<16x128xf32>
    %c0_6 = arith.constant 0 : index
    %c0_7 = arith.constant 0 : index
    %14 = vector.load %arg4[%c0_6, %c0_7] : memref<1x128xf32, #tpu.memory_space<vmem>>, vector<1x128xf32>
    %15 = vector.broadcast %14 : vector<1x128xf32> to vector<16x128xf32>
    %16 = arith.addf %13, %15 : vector<16x128xf32>
    %c0_8 = arith.constant 0 : index
    %c0_9 = arith.constant 0 : index
    %17 = vector.load %arg5[%c0_8, %c0_9] : memref<16x128xf32, #tpu.memory_space<vmem>>, vector<16x128xf32>
    tpu.vector_store %arg5[%c0_8, %c0_9], %16 {strides = array<i32>} : memref<16x128xf32, #tpu.memory_space<vmem>>, vector<16x128xf32>,
    return
  }
  func.func @transform_0(%arg0: i32) -> (i32, i32) {
    %c0_i32 = arith.constant 0 : i32
    %c0_i32_0 = arith.constant 0 : i32
    return %arg0, %c0_i32 : i32, i32
  }
  func.func @transform_1(%arg0: i32) -> (i32, i32) {
    %c0_i32 = arith.constant 0 : i32
    %c0_i32_0 = arith.constant 0 : i32
    %c0_i32_1 = arith.constant 0 : i32
    return %c0_i32, %c0_i32_0 : i32, i32
  }
  func.func @transform_2(%arg0: i32) -> (i32, i32) {
    %c0_i32 = arith.constant 0 : i32
    %c0_i32_0 = arith.constant 0 : i32
    %c0_i32_1 = arith.constant 0 : i32
    return %c0_i32, %c0_i32_0 : i32, i32
  }
  func.func @transform_3(%arg0: i32) -> (i32, i32) {
    %c0_i32 = arith.constant 0 : i32
    %c0_i32_0 = arith.constant 0 : i32
    %c0_i32_1 = arith.constant 0 : i32
    return %c0_i32, %c0_i32_0 : i32, i32
  }
  func.func @transform_4(%arg0: i32) -> (i32, i32) {
    %c0_i32 = arith.constant 0 : i32
    %c0_i32_0 = arith.constant 0 : i32
    return %arg0, %c0_i32 : i32, i32
  }
}

</mosaic_0001>

<llo_original>
// kernel: mlp_pallas.3
$region0: #{mlp_pallas.3}
  #allocation0 [shape = 'u32[]', space=smem, size = 0x4, offset = 0x4, fixed_abs, tag = 'smem constant byte address 0x4 - core index']
  #allocation1 [shape = 'u32[72,128]{1,0:T(1,128)}', space=vmem, size = 0x9000, scoped, tag = 'internal scratch']
  %s0 = inlined_call_operand.vmem [shape: f32[16,128], index: 0, kind: input, shape index: {}]
  %s1 = inlined_call_operand.vmem [shape: bf16[128,128], index: 1, kind: input, shape index: {}]
  %s2 = inlined_call_operand.vmem [shape: bf16[16,128], index: 2, kind: output, shape index: {0}]
  %s3 = inlined_call_operand.vmem [shape: f32[2,128], index: 3, kind: output, shape index: {1}]
  %4 = xla_tuple %s2, %s3
  %s5 = sld [smem:[#allocation0]]
  $region30: #{mlp_pallas.3} parent=0
    _
  %s7 = ssub.s32 1, %s5
  %s8 = scalar_select 0, %s7, %s5
  // Predicated region
  $region2: #{mlp_pallas.3} parent=0 // pred_check
    _
  $region3: #{mlp_pallas.3} parent=0 // pred_check_branch
    %10 = sbr.rel (0) target = $region5
  $region4: #{mlp_pallas.3} parent=0 // pred_region
    _
  $region5: #{mlp_pallas.3} parent=0 // pred_fallthru
    _
  // Predicated region
  $region6: #{mlp_pallas.3} parent=0 // pred_check
    _
  $region7: #{mlp_pallas.3} parent=0 // pred_check_branch
    %12 = sbr.rel (0) target = $region9
  $region8: #{mlp_pallas.3} parent=0 // pred_region
    _
  $region9: #{mlp_pallas.3} parent=0 // pred_fallthru
    _
  %p13 = scmp.eq.s32.totalorder 0, 0
  // Predicated region
  $region10: #{mlp_pallas.3} parent=0 // pred_check
    %p14 = pneg %p13
  $region11: #{mlp_pallas.3} parent=0 // pred_check_branch
    %16 = sbr.rel (%p14) target = $region13
  $region12: #{mlp_pallas.3} parent=0 // pred_region
    %17 = vst [vmem:[%s3] sm:$0x3] 0.0
  $region13: #{mlp_pallas.3} parent=0 // pred_fallthru
    _
  %v18 = vld [vmem:[%s0] sm:$0xff]
  %v19 = vld [vmem:[%s0 + $0x8] sm:$0xff]
  %v20 = vpack.c.bf16 %v19, %v18
  %v21 = vld [vmem:[%s1] sm:$0xf]
  %v22 = vld [vmem:[%s1 + $0x4] sm:$0xf]
  %v23 = vld [vmem:[%s1 + $0x8] sm:$0xf]
  %v24 = vld [vmem:[%s1 + $0xc] sm:$0xf]
  %v25 = vld [vmem:[%s1 + $0x10] sm:$0xf]
  %v26 = vld [vmem:[%s1 + $0x14] sm:$0xf]
  %v27 = vld [vmem:[%s1 + $0x18] sm:$0xf]
  %v28 = vld [vmem:[%s1 + $0x1c] sm:$0xf]
  %v29 = vld [vmem:[%s1 + $0x20] sm:$0xf]
  %v30 = vld [vmem:[%s1 + $0x24] sm:$0xf]
  %v31 = vld [vmem:[%s1 + $0x28] sm:$0xf]
  %v32 = vld [vmem:[%s1 + $0x2c] sm:$0xf]
  %v33 = vld [vmem:[%s1 + $0x30] sm:$0xf]
  %v34 = vld [vmem:[%s1 + $0x34] sm:$0xf]
  %v35 = vld [vmem:[%s1 + $0x38] sm:$0xf]
  %v36 = vld [vmem:[%s1 + $0x3c] sm:$0xf]
  %v53 = vunpack.c.l.b16 %v21
  %v54 = vunpack.c.l.b16 %v22
  %v55 = vunpack.c.l.b16 %v23
  %v56 = vunpack.c.l.b16 %v24
  %v57 = vunpack.c.l.b16 %v25
  %v58 = vunpack.c.l.b16 %v26
  %v59 = vunpack.c.l.b16 %v27
  %v60 = vunpack.c.l.b16 %v28
  %v61 = vunpack.c.l.b16 %v29
  %v62 = vunpack.c.l.b16 %v30
  %v63 = vunpack.c.l.b16 %v31
  %v64 = vunpack.c.l.b16 %v32
  %v65 = vunpack.c.l.b16 %v33
  %v66 = vunpack.c.l.b16 %v34
  %v67 = vunpack.c.l.b16 %v35
  %v68 = vunpack.c.l.b16 %v36
  %v69 = vpack.c.b16 %v54, %v53
  %v70 = vpack.c.b16 %v56, %v55
  %v71 = vpack.c.b16 %v58, %v57
  %v72 = vpack.c.b16 %v60, %v59
  %v73 = vpack.c.b16 %v62, %v61
  %v74 = vpack.c.b16 %v64, %v63
  %v75 = vpack.c.b16 %v66, %v65
  %v76 = vpack.c.b16 %v68, %v67
  %85 = vmatpush.bf16.msra.mxu0 %v76
  %86 = vmatpush.bf16.msra.mxu0 %v75
  %87 = vmatpush.bf16.msra.mxu0 %v74
  %88 = vmatpush.bf16.msra.mxu0 %v73
  %89 = vmatpush.bf16.msra.mxu0 %v72
  %90 = vmatpush.bf16.msra.mxu0 %v71
  %91 = vmatpush.bf16.msra.mxu0 %v70
  %92 = vmatpush.bf16.msra.mxu0 %v69
  %93 = vmatmul.bf16.gmra.mxu0 %v20
  %v94 = vpop.f32.mrf.mxu0
  %v95 = vadd.f32 0.0, %v94
  %v96 = vpop.f32.mrf.mxu0
  %v97 = vadd.f32 0.0, %v96
  %98 = vdwg.mxu0
  %v99 = vpack.c.bf16 %v95, %v95
  %v100 = vpack.c.bf16 %v97, %v97
  %101 = vst [vmem:[%s2] sm:$0xf] %v99
  %102 = vst [vmem:[%s2 + $0x4] sm:$0xf] %v100
  %v103 = vld [vmem:[%s3] sm:$0x1]
  %v104 = vadd.f32 %v95, %v97
  %v105 = vrot.slane %v104, 4
  %v106 = vadd.f32 %v104, %v105
  %v107 = vrot.slane %v106, 2
  %v108 = vadd.f32 %v106, %v107
  %v109 = vrot.slane %v108, 1
  %v110 = vadd.f32 %v108, %v109
  %v111 = vadd.f32 %v103, %v110
  %112 = vst [vmem:[%s3] sm:$0x1] %v111
  %v113 = vld [vmem:[%s3 + $0x1] sm:$0x1]
  %v114 = vmul.f32 %v95, %v95
  %v115 = vmul.f32 %v97, %v97
  %v116 = vadd.f32 %v114, %v115
  %v117 = vrot.slane %v116, 4
  %v118 = vadd.f32 %v116, %v117
  %v119 = vrot.slane %v118, 2
  %v120 = vadd.f32 %v118, %v119
  %v121 = vrot.slane %v120, 1
  %v122 = vadd.f32 %v120, %v121
  %v123 = vadd.f32 %v113, %v122
  %124 = vst [vmem:[%s3 + $0x1] sm:$0x1] %v123
  // Predicated region
  $region14: #{mlp_pallas.3} parent=0 // pred_check
    _
  $region15: #{mlp_pallas.3} parent=0 // pred_check_branch
    %126 = sbr.rel (0) target = $region17
  $region16: #{mlp_pallas.3} parent=0 // pred_region
    _
  $region17: #{mlp_pallas.3} parent=0 // pred_fallthru
    _
  // Predicated region
  $region18: #{mlp_pallas.3} parent=0 // pred_check
    _
  $region19: #{mlp_pallas.3} parent=0 // pred_check_branch
    %128 = sbr.rel (0) target = $region21
  $region20: #{mlp_pallas.3} parent=0 // pred_region
    _
  $region21: #{mlp_pallas.3} parent=0 // pred_fallthru
    _
  // Predicated region
  $region22: #{mlp_pallas.3} parent=0 // pred_check
    _
  $region23: #{mlp_pallas.3} parent=0 // pred_check_branch
    %130 = sbr.rel (0) target = $region25
  $region24: #{mlp_pallas.3} parent=0 // pred_region
    _
  $region25: #{mlp_pallas.3} parent=0 // pred_fallthru
    _
  // Predicated region
  $region26: #{mlp_pallas.3} parent=0 // pred_check
    _
  $region27: #{mlp_pallas.3} parent=0 // pred_check_branch
    %132 = sbr.rel (0) target = $region29
  $region28: #{mlp_pallas.3} parent=0 // pred_region
    _
  $region29: #{mlp_pallas.3} parent=0 // pred_fallthru
    _

// kernel: mlp_pallas.5
$region0: #{mlp_pallas.5}
  #allocation0 [shape = 'u32[]', space=smem, size = 0x4, offset = 0x4, fixed_abs, tag = 'smem constant byte address 0x4 - core index']
  #allocation1 [shape = 'u32[72,128]{1,0:T(1,128)}', space=vmem, size = 0x9000, scoped, tag = 'internal scratch']
  %s0 = inlined_call_operand.vmem [shape: bf16[16,128], index: 0, kind: input, shape index: {}]
  %s1 = inlined_call_operand.vmem [shape: f32[2,128], index: 1, kind: input, shape index: {}]
  %s2 = inlined_call_operand.vmem [shape: bf16[128,128], index: 2, kind: input, shape index: {}]
  %s3 = inlined_call_operand.vmem [shape: f32[1,128], index: 3, kind: input, shape index: {}]
  %s4 = inlined_call_operand.vmem [shape: f32[16,128], index: 4, kind: output, shape index: {}]
  %s5 = sld [smem:[#allocation0]]
  $region26: #{mlp_pallas.5} parent=0
    _
  %s7 = ssub.s32 1, %s5
  %s8 = scalar_select 0, %s7, %s5
  // Predicated region
  $region2: #{mlp_pallas.5} parent=0 // pred_check
    _
  $region3: #{mlp_pallas.5} parent=0 // pred_check_branch
    %10 = sbr.rel (0) target = $region5
  $region4: #{mlp_pallas.5} parent=0 // pred_region
    _
  $region5: #{mlp_pallas.5} parent=0 // pred_fallthru
    _
  // Predicated region
  $region6: #{mlp_pallas.5} parent=0 // pred_check
    _
  $region7: #{mlp_pallas.5} parent=0 // pred_check_branch
    %12 = sbr.rel (0) target = $region9
  $region8: #{mlp_pallas.5} parent=0 // pred_region
    _
  $region9: #{mlp_pallas.5} parent=0 // pred_fallthru
    _
  // Predicated region
  $region10: #{mlp_pallas.5} parent=0 // pred_check
    _
  $region11: #{mlp_pallas.5} parent=0 // pred_check_branch
    %14 = sbr.rel (0) target = $region13
  $region12: #{mlp_pallas.5} parent=0 // pred_region
    _
  $region13: #{mlp_pallas.5} parent=0 // pred_fallthru
    _
  // Predicated region
  $region14: #{mlp_pallas.5} parent=0 // pred_check
    _
  $region15: #{mlp_pallas.5} parent=0 // pred_check_branch
    %16 = sbr.rel (0) target = $region17
  $region16: #{mlp_pallas.5} parent=0 // pred_region
    _
  $region17: #{mlp_pallas.5} parent=0 // pred_fallthru
    _
  %v17 = vld [vmem:[%s1] sm:$0x3]
  %v18 = vld [vmem:[%s0] sm:$0xf]
  %v19 = vld [vmem:[%s0 + $0x4] sm:$0xf]
  %v20 = vunpack.c.l.bf16 %v18
  %v21 = vunpack.c.l.bf16 %v19
  %v22 = vperm.slane %v17, 0
  %v23 = vmul.f32 %v20, %v22
  %v24 = vmul.f32 %v21, %v22
  %v25 = vperm.slane %v17, 1
  %v26 = vadd.f32 %v23, %v25
  %v27 = vadd.f32 %v24, %v25
  %v28 = vmax.f32 %v26, 0.0
  %v29 = vmax.f32 %v27, 0.0
  %v30 = vpack.c.bf16 %v29, %v28
  %v31 = vld [vmem:[%s2] sm:$0xf]
  %v32 = vld [vmem:[%s2 + $0x4] sm:$0xf]
  %v33 = vld [vmem:[%s2 + $0x8] sm:$0xf]
  %v34 = vld [vmem:[%s2 + $0xc] sm:$0xf]
  %v35 = vld [vmem:[%s2 + $0x10] sm:$0xf]
  %v36 = vld [vmem:[%s2 + $0x14] sm:$0xf]
  %v37 = vld [vmem:[%s2 + $0x18] sm:$0xf]
  %v38 = vld [vmem:[%s2 + $0x1c] sm:$0xf]
  %v39 = vld [vmem:[%s2 + $0x20] sm:$0xf]
  %v40 = vld [vmem:[%s2 + $0x24] sm:$0xf]
  %v41 = vld [vmem:[%s2 + $0x28] sm:$0xf]
  %v42 = vld [vmem:[%s2 + $0x2c] sm:$0xf]
  %v43 = vld [vmem:[%s2 + $0x30] sm:$0xf]
  %v44 = vld [vmem:[%s2 + $0x34] sm:$0xf]
  %v45 = vld [vmem:[%s2 + $0x38] sm:$0xf]
  %v46 = vld [vmem:[%s2 + $0x3c] sm:$0xf]
  %v47 = vld [vmem:[%s3] sm:$0x1]
  %v49 = vperm.slane %v47, 0
  %v67 = vunpack.c.l.b16 %v31
  %v68 = vunpack.c.l.b16 %v32
  %v69 = vunpack.c.l.b16 %v33
  %v70 = vunpack.c.l.b16 %v34
  %v71 = vunpack.c.l.b16 %v35
  %v72 = vunpack.c.l.b16 %v36
  %v73 = vunpack.c.l.b16 %v37
  %v74 = vunpack.c.l.b16 %v38
  %v75 = vunpack.c.l.b16 %v39
  %v76 = vunpack.c.l.b16 %v40
  %v77 = vunpack.c.l.b16 %v41
  %v78 = vunpack.c.l.b16 %v42
  %v79 = vunpack.c.l.b16 %v43
  %v80 = vunpack.c.l.b16 %v44
  %v81 = vunpack.c.l.b16 %v45
  %v82 = vunpack.c.l.b16 %v46
  %v83 = vpack.c.b16 %v68, %v67
  %v84 = vpack.c.b16 %v70, %v69
  %v85 = vpack.c.b16 %v72, %v71
  %v86 = vpack.c.b16 %v74, %v73
  %v87 = vpack.c.b16 %v76, %v75
  %v88 = vpack.c.b16 %v78, %v77
  %v89 = vpack.c.b16 %v80, %v79
  %v90 = vpack.c.b16 %v82, %v81
  %99 = vmatpush.bf16.msra.mxu0 %v90
  %100 = vmatpush.bf16.msra.mxu0 %v89
  %101 = vmatpush.bf16.msra.mxu0 %v88
  %102 = vmatpush.bf16.msra.mxu0 %v87
  %103 = vmatpush.bf16.msra.mxu0 %v86
  %104 = vmatpush.bf16.msra.mxu0 %v85
  %105 = vmatpush.bf16.msra.mxu0 %v84
  %106 = vmatpush.bf16.msra.mxu0 %v83
  %107 = vmatmul.bf16.gmra.mxu0 %v30
  %v108 = vpop.f32.mrf.mxu0
  %v109 = vadd.f32 %v49, %v108
  %v110 = vpop.f32.mrf.mxu0
  %v111 = vadd.f32 %v49, %v110
  %112 = vdwg.mxu0
  %113 = vst [vmem:[%s4] sm:$0xff] %v109
  %114 = vst [vmem:[%s4 + $0x8] sm:$0xff] %v111
  // Predicated region
  $region18: #{mlp_pallas.5} parent=0 // pred_check
    _
  $region19: #{mlp_pallas.5} parent=0 // pred_check_branch
    %116 = sbr.rel (0) target = $region21
  $region20: #{mlp_pallas.5} parent=0 // pred_region
    _
  $region21: #{mlp_pallas.5} parent=0 // pred_fallthru
    _
  // Predicated region
  $region22: #{mlp_pallas.5} parent=0 // pred_check
    _
  $region23: #{mlp_pallas.5} parent=0 // pred_check_branch
    %118 = sbr.rel (0) target = $region25
  $region24: #{mlp_pallas.5} parent=0 // pred_region
    _
  $region25: #{mlp_pallas.5} parent=0 // pred_fallthru
    _

// kernel: mlp_pallas.4
$region0: #{mlp_pallas.4}
  #allocation0 [shape = 'u32[]', space=smem, size = 0x4, offset = 0x4, fixed_abs, tag = 'smem constant byte address 0x4 - core index']
  #allocation1 [shape = 'u32[72,128]{1,0:T(1,128)}', space=vmem, size = 0x9000, scoped, tag = 'internal scratch']
  %s0 = inlined_call_operand.vmem [shape: bf16[16,128], index: 0, kind: input, shape index: {}]
  %s1 = inlined_call_operand.vmem [shape: f32[2,128], index: 1, kind: input, shape index: {}]
  %s2 = inlined_call_operand.vmem [shape: bf16[128,128], index: 2, kind: input, shape index: {}]
  %s3 = inlined_call_operand.vmem [shape: bf16[16,128], index: 3, kind: output, shape index: {0}]
  %s4 = inlined_call_operand.vmem [shape: f32[2,128], index: 4, kind: output, shape index: {1}]
  %5 = xla_tuple %s3, %s4
  %s6 = sld [smem:[#allocation0]]
  $region42: #{mlp_pallas.4} parent=0
    _
  %s8 = ssub.s32 1, %s6
  %s9 = scalar_select 0, %s8, %s6
  // Predicated region
  $region2: #{mlp_pallas.4} parent=0 // pred_check
    _
  $region3: #{mlp_pallas.4} parent=0 // pred_check_branch
    %11 = sbr.rel (0) target = $region5
  $region4: #{mlp_pallas.4} parent=0 // pred_region
    _
  $region5: #{mlp_pallas.4} parent=0 // pred_fallthru
    _
  // Predicated region
  $region6: #{mlp_pallas.4} parent=0 // pred_check
    _
  $region7: #{mlp_pallas.4} parent=0 // pred_check_branch
    %13 = sbr.rel (0) target = $region9
  $region8: #{mlp_pallas.4} parent=0 // pred_region
    _
  $region9: #{mlp_pallas.4} parent=0 // pred_fallthru
    _
  // Predicated region
  $region10: #{mlp_pallas.4} parent=0 // pred_check
    _
  $region11: #{mlp_pallas.4} parent=0 // pred_check_branch
    %15 = sbr.rel (0) target = $region13
  $region12: #{mlp_pallas.4} parent=0 // pred_region
    _
  $region13: #{mlp_pallas.4} parent=0 // pred_fallthru
    _
  %p16 = scmp.eq.s32.totalorder 0, 0
  // Predicated region
  $region14: #{mlp_pallas.4} parent=0 // pred_check
    %p17 = pneg %p16
  $region15: #{mlp_pallas.4} parent=0 // pred_check_branch
    %19 = sbr.rel (%p17) target = $region17
  $region16: #{mlp_pallas.4} parent=0 // pred_region
    %20 = vst [vmem:[%s4] sm:$0x3] 0.0
  $region17: #{mlp_pallas.4} parent=0 // pred_fallthru
    _
  %v21 = vld [vmem:[%s1] sm:$0x3]
  %v22 = vld [vmem:[%s0] sm:$0xf]
  %v23 = vld [vmem:[%s0 + $0x4] sm:$0xf]
  %v24 = vunpack.c.l.bf16 %v22
  %v25 = vunpack.c.l.bf16 %v23
  %v26 = vperm.slane %v21, 0
  %v27 = vmul.f32 %v24, %v26
  %v28 = vmul.f32 %v25, %v26
  %v29 = vperm.slane %v21, 1
  %v30 = vadd.f32 %v27, %v29
  %v31 = vadd.f32 %v28, %v29
  %v32 = vmax.f32 %v30, 0.0
  %v33 = vmax.f32 %v31, 0.0
  %v34 = vpack.c.bf16 %v33, %v32
  %v35 = vld [vmem:[%s2] sm:$0xf]
  %v36 = vld [vmem:[%s2 + $0x4] sm:$0xf]
  %v37 = vld [vmem:[%s2 + $0x8] sm:$0xf]
  %v38 = vld [vmem:[%s2 + $0xc] sm:$0xf]
  %v39 = vld [vmem:[%s2 + $0x10] sm:$0xf]
  %v40 = vld [vmem:[%s2 + $0x14] sm:$0xf]
  %v41 = vld [vmem:[%s2 + $0x18] sm:$0xf]
  %v42 = vld [vmem:[%s2 + $0x1c] sm:$0xf]
  %v43 = vld [vmem:[%s2 + $0x20] sm:$0xf]
  %v44 = vld [vmem:[%s2 + $0x24] sm:$0xf]
  %v45 = vld [vmem:[%s2 + $0x28] sm:$0xf]
  %v46 = vld [vmem:[%s2 + $0x2c] sm:$0xf]
  %v47 = vld [vmem:[%s2 + $0x30] sm:$0xf]
  %v48 = vld [vmem:[%s2 + $0x34] sm:$0xf]
  %v49 = vld [vmem:[%s2 + $0x38] sm:$0xf]
  %v50 = vld [vmem:[%s2 + $0x3c] sm:$0xf]
  %v67 = vunpack.c.l.b16 %v35
  %v68 = vunpack.c.l.b16 %v36
  %v69 = vunpack.c.l.b16 %v37
  %v70 = vunpack.c.l.b16 %v38
  %v71 = vunpack.c.l.b16 %v39
  %v72 = vunpack.c.l.b16 %v40
  %v73 = vunpack.c.l.b16 %v41
  %v74 = vunpack.c.l.b16 %v42
  %v75 = vunpack.c.l.b16 %v43
  %v76 = vunpack.c.l.b16 %v44
  %v77 = vunpack.c.l.b16 %v45
  %v78 = vunpack.c.l.b16 %v46
  %v79 = vunpack.c.l.b16 %v47
  %v80 = vunpack.c.l.b16 %v48
  %v81 = vunpack.c.l.b16 %v49
  %v82 = vunpack.c.l.b16 %v50
  %v83 = vpack.c.b16 %v68, %v67
  %v84 = vpack.c.b16 %v70, %v69
  %v85 = vpack.c.b16 %v72, %v71
  %v86 = vpack.c.b16 %v74, %v73
  %v87 = vpack.c.b16 %v76, %v75
  %v88 = vpack.c.b16 %v78, %v77
  %v89 = vpack.c.b16 %v80, %v79
  %v90 = vpack.c.b16 %v82, %v81
  %99 = vmatpush.bf16.msra.mxu0 %v90
  %100 = vmatpush.bf16.msra.mxu0 %v89
  %101 = vmatpush.bf16.msra.mxu0 %v88
  %102 = vmatpush.bf16.msra.mxu0 %v87
  %103 = vmatpush.bf16.msra.mxu0 %v86
  %104 = vmatpush.bf16.msra.mxu0 %v85
  %105 = vmatpush.bf16.msra.mxu0 %v84
  %106 = vmatpush.bf16.msra.mxu0 %v83
  %107 = vmatmul.bf16.gmra.mxu0 %v34
  %v108 = vpop.f32.mrf.mxu0
  %v109 = vadd.f32 0.0, %v108
  %v110 = vpop.f32.mrf.mxu0
  %v111 = vadd.f32 0.0, %v110
  %112 = vdwg.mxu0
  %v113 = vpack.c.bf16 %v109, %v109
  %v114 = vpack.c.bf16 %v111, %v111
  %115 = vst [vmem:[%s3] sm:$0xf] %v113
  %116 = vst [vmem:[%s3 + $0x4] sm:$0xf] %v114
  %p117 = scmp.ne.s32.totalorder 0, 0
  // Predicated region
  $region18: #{mlp_pallas.4} parent=0 // pred_check
    %p118 = pneg %p117
  $region19: #{mlp_pallas.4} parent=0 // pred_check_branch
    %120 = sbr.rel (%p118) target = $region21
  $region20: #{mlp_pallas.4} parent=0 // pred_region
    %v121 = vld [vmem:[%s4] sm:$0x1]
    %v122 = vadd.f32 %v109, %v111
    %v123 = vrot.slane %v122, 4
    %v124 = vadd.f32 %v122, %v123
    %v125 = vrot.slane %v124, 2
    %v126 = vadd.f32 %v124, %v125
    %v127 = vrot.slane %v126, 1
    %v128 = vadd.f32 %v126, %v127
    %v129 = vadd.f32 %v121, %v128
    %130 = vst [vmem:[%s4] sm:$0x1] %v129
    %v131 = vld [vmem:[%s4 + $0x1] sm:$0x1]
    %v132 = vmul.f32 %v109, %v109
    %v133 = vmul.f32 %v111, %v111
    %v134 = vadd.f32 %v132, %v133
    %v135 = vrot.slane %v134, 4
    %v136 = vadd.f32 %v134, %v135
    %v137 = vrot.slane %v136, 2
    %v138 = vadd.f32 %v136, %v137
    %v139 = vrot.slane %v138, 1
    %v140 = vadd.f32 %v138, %v139
    %v141 = vadd.f32 %v131, %v140
    %142 = vst [vmem:[%s4 + $0x1] sm:$0x1] %v141
  $region21: #{mlp_pallas.4} parent=0 // pred_fallthru
    _
  // Predicated region
  $region22: #{mlp_pallas.4} parent=0 // pred_check
    %p143 = pneg %p16
  $region23: #{mlp_pallas.4} parent=0 // pred_check_branch
    %145 = sbr.rel (%p143) target = $region25
  $region24: #{mlp_pallas.4} parent=0 // pred_region
    %v146 = vlaneseq
    %v147 = vshrl.u32 %v146, 7
    %v148 = vadd.s32 %v147, 8
    %s149 = smul.u32 0, 16
    %v150 = vstv %s149
    %v151 = vadd.s32 %v147, %v150
    %v152 = vadd.s32 %v148, %v150
    %vm153 = vcmp.lt.s32.totalorder %v151, 8
    %vm154 = vcmp.lt.s32.totalorder %v152, 8
    %v155 = vsel %vm153, %v109, 0.0
    %v156 = vsel %vm154, %v111, 0.0
    %v157 = vld [vmem:[%s4] sm:$0x1]
    %v158 = vadd.f32 %v155, %v156
    %v159 = vrot.slane %v158, 4
    %v160 = vadd.f32 %v158, %v159
    %v161 = vrot.slane %v160, 2
    %v162 = vadd.f32 %v160, %v161
    %v163 = vrot.slane %v162, 1
    %v164 = vadd.f32 %v162, %v163
    %v165 = vadd.f32 %v157, %v164
    %166 = vst [vmem:[%s4] sm:$0x1] %v165
    %v167 = vld [vmem:[%s4 + $0x1] sm:$0x1]
    %v168 = vmul.f32 %v155, %v155
    %v169 = vmul.f32 %v156, %v156
    %v170 = vadd.f32 %v168, %v169
    %v171 = vrot.slane %v170, 4
    %v172 = vadd.f32 %v170, %v171
    %v173 = vrot.slane %v172, 2
    %v174 = vadd.f32 %v172, %v173
    %v175 = vrot.slane %v174, 1
    %v176 = vadd.f32 %v174, %v175
    %v177 = vadd.f32 %v167, %v176
    %178 = vst [vmem:[%s4 + $0x1] sm:$0x1] %v177
  $region25: #{mlp_pallas.4} parent=0 // pred_fallthru
    _
  // Predicated region
  $region26: #{mlp_pallas.4} parent=0 // pred_check
    _
  $region27: #{mlp_pallas.4} parent=0 // pred_check_branch
    %180 = sbr.rel (0) target = $region29
  $region28: #{mlp_pallas.4} parent=0 // pred_region
    _
  $region29: #{mlp_pallas.4} parent=0 // pred_fallthru
    _
  // Predicated region
  $region30: #{mlp_pallas.4} parent=0 // pred_check
    _
  $region31: #{mlp_pallas.4} parent=0 // pred_check_branch
    %182 = sbr.rel (0) target = $region33
  $region32: #{mlp_pallas.4} parent=0 // pred_region
    _
  $region33: #{mlp_pallas.4} parent=0 // pred_fallthru
    _
  // Predicated region
  $region34: #{mlp_pallas.4} parent=0 // pred_check
    _
  $region35: #{mlp_pallas.4} parent=0 // pred_check_branch
    %184 = sbr.rel (0) target = $region37
  $region36: #{mlp_pallas.4} parent=0 // pred_region
    _
  $region37: #{mlp_pallas.4} parent=0 // pred_fallthru
    _
  // Predicated region
  $region38: #{mlp_pallas.4} parent=0 // pred_check
    _
  $region39: #{mlp_pallas.4} parent=0 // pred_check_branch
    %186 = sbr.rel (0) target = $region41
  $region40: #{mlp_pallas.4} parent=0 // pred_region
    _
  $region41: #{mlp_pallas.4} parent=0 // pred_fallthru
    _

</llo_original>
